<compile_context>
chip_gen: v7x
topology: tpu7x:2x2x1
jax: 0.10.0
libtpu: 0.0.40
codegen_flags: <defaults>
</compile_context>

<pallas_src>
import jax
import jax.numpy as jnp
from jax.experimental import pallas as pl
from jax.experimental.pallas import tpu as pltpu


def ar2_kernel(x_ref, wc_ref, c_ref, o_ref):
    # x_ref : (TB, F)  one batch block of flattened input rows (original dtype)
    # wc_ref: (1, F)   folded weights (f32), VMEM-resident across all grid steps
    # c_ref : (1, 1)   folded bias in SMEM
    # o_ref : (TB, 1)  per-row outputs (natural sublane-major layout, no relayout)
    x = x_ref[...].astype(jnp.float32)            # accumulate in f32
    wc = wc_ref[...]                              # (1, F); broadcasts over sublanes (VPU)
    r = jnp.sum(x * wc, axis=1, keepdims=True)    # lane reduce (XLU), stays (TB, 1)
    o_ref[...] = (r + c_ref[0, 0]).astype(o_ref.dtype)


def _round_up(n, m):
    return ((n + m - 1) // m) * m


def _round_down(n, m):
    return (n // m) * m


def _pick_block_b(B, row_bytes):
    """F-aware batch block: ~4 MiB per step, <= ~6 MiB per buffer (fits every
    generation's scoped VMEM when double-buffered), and >= 2 grid blocks
    whenever the batch is large enough (feeds both v7x TensorCores)."""
    target_bytes = 4 << 20
    budget_bytes = 6 << 20
    want = max(target_bytes // row_bytes, 1)
    cap = max(budget_bytes // row_bytes, 1)
    align = 128 if cap >= 128 else 8
    # TODO(synk): for extremely large W1*W2 (block_b pinned at 8 and still over
    # budget) add a trailing 'arbitrary' F grid axis with an f32 VMEM
    # accumulator instead of shrinking block_b further.
    bb = max(align, _round_down(min(want, cap), align))
    # don't build a block meaningfully larger than the whole batch
    bb = min(bb, _round_up(B, align))
    # guarantee >= 2 grid blocks when the batch allows it (v7x megacore)
    if B >= 2 * align:
        bb = min(bb, _round_up(-(-B // 2), align))
    return bb


def ar2_forward(x, w1, b1, w2, b2, *, block_b=None):
    """x: (B, W1, W2); w1: (1, W1) or (W1,); b1: (1,)/scalar; w2: (1, W2); b2: (1,)/scalar."""
    B, W1, W2 = x.shape
    F = W1 * W2
    itemsize = jnp.dtype(x.dtype).itemsize

    # ---- fold the two linears (f32 to preserve tolerance) ----
    w1v = w1.reshape(W1).astype(jnp.float32)
    w2v = w2.reshape(W2).astype(jnp.float32)
    wc = (w1v[:, None] * w2v[None, :]).reshape(1, F)                      # (1, F)
    c = (b1.reshape(()).astype(jnp.float32) * jnp.sum(w2v)
         + b2.reshape(()).astype(jnp.float32)).reshape(1, 1)              # (1, 1)

    # ---- flatten (contiguous reshape) and pick the batch block ----
    x_flat = x.reshape(B, F)
    tiny = B * F * itemsize <= (1 << 20)
    if block_b is None:
        # tiny problems: one full-array block (no padding, no masked tail,
        # minimal launch overhead); otherwise F-aware sizing.
        block_b = B if tiny else _pick_block_b(B, F * itemsize)
    elif block_b != B:
        # guard user-supplied block sizes against the (8, 128) layout rule
        block_b = max(8, _round_down(block_b, 8))
    num_blocks = pl.cdiv(B, block_b)

    out = pl.pallas_call(
        ar2_kernel,
        out_shape=jax.ShapeDtypeStruct((B, 1), x.dtype),
        grid_spec=pltpu.PrefetchScalarGridSpec(
            num_scalar_prefetch=0,
            grid=(num_blocks,),
            in_specs=[
                pl.BlockSpec((block_b, F), lambda i: (i, 0)),    # streamed input
                pl.BlockSpec((1, F), lambda i: (0, 0)),          # resident folded weights
                pl.BlockSpec(memory_space=pltpu.SMEM),           # scalar folded bias
            ],
            out_specs=pl.BlockSpec((block_b, 1), lambda i: (i, 0)),
        ),
        compiler_params=pltpu.CompilerParams(
            dimension_semantics=("parallel",),   # v7x: batch blocks split across TCs
        ),
        cost_estimate=pl.CostEstimate(
            flops=2 * B * F,
            transcendentals=0,
            bytes_accessed=B * F * itemsize + B * itemsize + F * 4 + 4,
        ),
    )(x_flat, wc, c)

    return out


def _reference(x, w1, b1, w2, b2):
    # Pure-JAX reference mirroring the PyTorch forward exactly.
    xt = jnp.transpose(x, (0, 2, 1))                       # (B, W2, W1)
    y1 = xt @ w1.T + b1                                    # (B, W2, 1)
    y1 = jnp.squeeze(y1, 2)                                # (B, W2)
    return y1 @ w2.T + b2                                  # (B, 1)


if __name__ == "__main__":
    # Small shapes consistent with the module: x : (batch, window1, window2)
    B, WINDOW1, WINDOW2 = 2, 8, 16

    key = jax.random.PRNGKey(0)
    kx, kw1, kb1, kw2, kb2, kx2 = jax.random.split(key, 6)

    x = jax.random.normal(kx, (B, WINDOW1, WINDOW2), dtype=jnp.float32)

    # Deterministic parameter init mimicking nn.Linear (uniform +-1/sqrt(fan_in)).
    bound1 = 1.0 / (WINDOW1 ** 0.5)
    bound2 = 1.0 / (WINDOW2 ** 0.5)
    w1 = jax.random.uniform(kw1, (1, WINDOW1), jnp.float32, -bound1, bound1)
    b1 = jax.random.uniform(kb1, (1,), jnp.float32, -bound1, bound1)
    w2 = jax.random.uniform(kw2, (1, WINDOW2), jnp.float32, -bound2, bound2)
    b2 = jax.random.uniform(kb2, (1,), jnp.float32, -bound2, bound2)

    # --- primary (small) check: tiny-B fast path ---
    out = jax.block_until_ready(ar2_forward(x, w1, b1, w2, b2))
    ref = _reference(x, w1, b1, w2, b2)
    assert out.shape == (B, 1)
    assert jnp.allclose(out, ref, atol=1e-5, rtol=1e-5), (out, ref)

    # --- secondary sanity check: blocked path with a ragged tail block ---
    B2 = 4100
    x2 = jax.random.normal(kx2, (B2, WINDOW1, WINDOW2), dtype=jnp.float32)
    out2 = jax.block_until_ready(ar2_forward(x2, w1, b1, w2, b2))
    ref2 = _reference(x2, w1, b1, w2, b2)
    assert out2.shape == (B2, 1)
    assert jnp.allclose(out2, ref2, atol=1e-4, rtol=1e-4)

    print("KERNEL_OK")
</pallas_src>

<mosaic_0001>
module attributes {stable_mosaic.version = 11 : i64} {
  func.func @ar2_kernel(%arg0: i32, %arg1: memref<2x128xf32, #tpu.memory_space<vmem>>, %arg2: memref<1x128xf32, #tpu.memory_space<vmem>>, %arg3: memref<1x1xf32, #tpu.memory_space<smem>>, %arg4: memref<2x1xf32, #tpu.memory_space<vmem>>) attributes {dimension_semantics = [#tpu.dimension_semantics<parallel>], iteration_bounds = array<i64: 1>, scalar_prefetch = 0 : i64, scratch_operands = 0 : i64, tpu.core_type = #tpu.core_type<tc>, window_params = [{transform_indices = @transform_0, window_bounds = array<i64: 2, 128>}, {pipeline_mode = #tpu.pipeline_mode<synchronous>, transform_indices = @transform_1, window_bounds = array<i64: 1, 128>}, {transform_indices = @transform_2, window_bounds = array<i64: 1, 1>}, {transform_indices = @transform_3, window_bounds = array<i64: 2, 1>}]} {
    %c0 = arith.constant 0 : index
    %c0_0 = arith.constant 0 : index
    %0 = vector.load %arg1[%c0, %c0_0] : memref<2x128xf32, #tpu.memory_space<vmem>>, vector<2x128xf32>
    %c0_1 = arith.constant 0 : index
    %c0_2 = arith.constant 0 : index
    %1 = vector.load %arg2[%c0_1, %c0_2] : memref<1x128xf32, #tpu.memory_space<vmem>>, vector<1x128xf32>
    %2 = vector.broadcast %1 : vector<1x128xf32> to vector<2x128xf32>
    %3 = arith.mulf %0, %2 : vector<2x128xf32>
    %cst = arith.constant dense<0.000000e+00> : vector<2xf32>
    %4 = vector.multi_reduction <add>, %3, %cst [1] : vector<2x128xf32> to vector<2xf32>
    %5 = vector.shape_cast %4 : vector<2xf32> to vector<2x1xf32>
    %c0_3 = arith.constant 0 : index
    %c0_4 = arith.constant 0 : index
    %6 = memref.load %arg3[%c0_3, %c0_4] : memref<1x1xf32, #tpu.memory_space<smem>>
    %7 = vector.broadcast %6 : f32 to vector<2x1xf32>
    %8 = arith.addf %5, %7 : vector<2x1xf32>
    %c0_5 = arith.constant 0 : index
    %c0_6 = arith.constant 0 : index
    %9 = vector.load %arg4[%c0_5, %c0_6] : memref<2x1xf32, #tpu.memory_space<vmem>>, vector<2x1xf32>
    tpu.vector_store %arg4[%c0_5, %c0_6], %8 {strides = array<i32>} : memref<2x1xf32, #tpu.memory_space<vmem>>, vector<2x1xf32>,
    return
  }
  func.func @transform_0(%arg0: i32) -> (i32, i32) {
    %c0_i32 = arith.constant 0 : i32
    %c0_i32_0 = arith.constant 0 : i32
    return %arg0, %c0_i32 : i32, i32
  }
  func.func @transform_1(%arg0: i32) -> (i32, i32) {
    %c0_i32 = arith.constant 0 : i32
    %c0_i32_0 = arith.constant 0 : i32
    %c0_i32_1 = arith.constant 0 : i32
    return %c0_i32, %c0_i32_0 : i32, i32
  }
  func.func @transform_2(%arg0: i32) -> (i32, i32) {
    %c0_i32 = arith.constant 0 : i32
    %c0_i32_0 = arith.constant 0 : i32
    %c0_i32_1 = arith.constant 0 : i32
    return %c0_i32, %c0_i32_0 : i32, i32
  }
  func.func @transform_3(%arg0: i32) -> (i32, i32) {
    %c0_i32 = arith.constant 0 : i32
    %c0_i32_0 = arith.constant 0 : i32
    return %arg0, %c0_i32 : i32, i32
  }
}

</mosaic_0001>

<llo_original>
// kernel: tpu_custom_call.1
$region0: #{tpu_custom_call.1}
  #allocation0 [shape = 'u32[]', space=smem, size = 0x4, offset = 0x4, fixed_abs, tag = 'smem constant byte address 0x4 - core index']
  #allocation1 [shape = 'u32[144,128]{1,0:T(1,128)}', space=vmem, size = 0x12000, scoped, tag = 'internal scratch']
  #allocation2 [shape = 'f32[1,1]{1,0:T(1,128)S(6)}', space=smem, size = 0x200, scoped, tag = 'scoped memory for tpu_custom_call.1']
  %s0 = inlined_call_operand.vmem [shape: f32[2,128], index: 0, kind: input, shape index: {}]
  %s1 = inlined_call_operand.vmem [shape: f32[1,128], index: 1, kind: input, shape index: {}]
  %s2 = inlined_call_operand.<no memory space> [shape: f32[1,1], index: 2, kind: input, shape index: {}]
  %s3 = inlined_call_operand.vmem [shape: f32[2,1], index: 3, kind: output, shape index: {}]
  %s4 = sld [smem:[#allocation0]]
  $region22: #{tpu_custom_call.1} parent=0
    _
  %s6 = ssub.s32 1, %s4
  %s7 = scalar_select 0, %s6, %s4
  %8 = sst [smem:[#allocation2]] %s2
  // Predicated region
  $region2: #{tpu_custom_call.1} parent=0 // pred_check
    _
  $region3: #{tpu_custom_call.1} parent=0 // pred_check_branch
    %10 = sbr.rel (0) target = $region5
  $region4: #{tpu_custom_call.1} parent=0 // pred_region
    _
  $region5: #{tpu_custom_call.1} parent=0 // pred_fallthru
    _
  // Predicated region
  $region6: #{tpu_custom_call.1} parent=0 // pred_check
    _
  $region7: #{tpu_custom_call.1} parent=0 // pred_check_branch
    %12 = sbr.rel (0) target = $region9
  $region8: #{tpu_custom_call.1} parent=0 // pred_region
    _
  $region9: #{tpu_custom_call.1} parent=0 // pred_fallthru
    _
  // Predicated region
  $region10: #{tpu_custom_call.1} parent=0 // pred_check
    _
  $region11: #{tpu_custom_call.1} parent=0 // pred_check_branch
    %14 = sbr.rel (0) target = $region13
  $region12: #{tpu_custom_call.1} parent=0 // pred_region
    _
  $region13: #{tpu_custom_call.1} parent=0 // pred_fallthru
    _
  %v15 = vld [vmem:[%s0] sm:$0x3]
  %v16 = vld [vmem:[%s1] sm:$0x1]
  %v18 = vlaneseq
  %v19 = vshrl.u32 %v18, 7
  %v20 = vsub.s32 0, %v19
  %v21 = vrot.slane %v16, %v20
  %v23 = vmul.f32 %v15, %v21
  %vm24 = vcmask 1041408
  %v25 = vsel %vm24, %v23, 0.0
  %26 = vadd.xlane.f32.xlu0 %v25
  %v27 = vpop.xlane.xlu0 %26
  %s28 = sld [smem:[#allocation2]]
  %v29 = vstv %s28
  %v30 = vadd.f32 %v27, %v29
  %vm31 = vcmask 1024
  %32 = vst.msk [vmem:[%s3] sm:$0x3] %vm31, %v30
  // Predicated region
  $region14: #{tpu_custom_call.1} parent=0 // pred_check
    _
  $region15: #{tpu_custom_call.1} parent=0 // pred_check_branch
    %34 = sbr.rel (0) target = $region17
  $region16: #{tpu_custom_call.1} parent=0 // pred_region
    _
  $region17: #{tpu_custom_call.1} parent=0 // pred_fallthru
    _
  // Predicated region
  $region18: #{tpu_custom_call.1} parent=0 // pred_check
    _
  $region19: #{tpu_custom_call.1} parent=0 // pred_check_branch
    %36 = sbr.rel (0) target = $region21
  $region20: #{tpu_custom_call.1} parent=0 // pred_region
    _
  $region21: #{tpu_custom_call.1} parent=0 // pred_fallthru
    _

</llo_original>
